<compile_context>
chip_gen: v5e
topology: v5e:2x2
jax: 0.10.0
libtpu: 0.0.40
codegen_flags: <defaults>
</compile_context>

<pallas_src>
import math

import jax
import jax.numpy as jnp
from jax.experimental import pallas as pl
from jax.experimental.pallas import tpu as pltpu

_LANE = 128
_SUBLANE = 8


def _flat_to_slab(flat, pad_value):
    """(n,) -> (rows, 128) with rows % 8 == 0.  Reshape is free; a small
    neutral pad is only materialized when n % 1024 != 0."""
    n = flat.shape[0]
    rem = (-n) % (_SUBLANE * _LANE)
    if rem:
        flat = jnp.pad(flat, (0, rem), constant_values=pad_value)
    return flat.reshape(-1, _LANE)


def _pick_tile(rows, itemsize):
    max_rows = 2048 if itemsize <= 2 else 1024
    return min(max_rows, rows)          # rows is a multiple of 8 already


def _hw_config():
    """(num_splits, dimension_semantics): engage both TCs only on v7x."""
    try:
        kind = jax.devices()[0].device_kind.lower()
    except Exception:
        kind = ""
    if "v7" in kind:
        core_parallel = getattr(pltpu, "CORE_PARALLEL", "parallel")
        return 2, (core_parallel, "arbitrary")
    return 1, ("arbitrary", "arbitrary")


def _make_kernel(x_rows, x_tile, n_mse_blocks, lik_meta, bps):
    """lik_meta: list of (rows, tile, n_blocks) for each likelihood slab."""
    n_lik = len(lik_meta)

    def kernel(*refs):
        x_ref, t_ref = refs[0], refs[1]
        lik_refs = refs[2:2 + n_lik]
        out_ref = refs[2 + n_lik]
        acc_sq = refs[3 + n_lik]
        acc_log = refs[4 + n_lik]

        c = pl.program_id(0)                 # split (TensorCore on v7x)
        j = pl.program_id(1)                 # tile index within the split
        g = c * bps + j                      # global tile index

        @pl.when(j == 0)
        def _init():
            acc_sq[...] = jnp.zeros_like(acc_sq)
            acc_log[...] = jnp.zeros_like(acc_log)

        # --- distortion: squared error, tree-reduced to one vreg ---
        @pl.when(g < n_mse_blocks)
        def _mse():
            d = x_ref[...].astype(jnp.float32) - t_ref[...].astype(jnp.float32)
            sq = d * d
            if x_rows % x_tile:              # static: ragged last tile
                rows_left = x_rows - g * x_tile
                rid = jax.lax.broadcasted_iota(jnp.int32, sq.shape, 0)
                sq = jnp.where(rid < rows_left, sq, 0.0)
            acc_sq[...] += jnp.sum(
                sq.reshape(x_tile // _SUBLANE, _SUBLANE, _LANE), axis=0)

        # --- rate: log(likelihoods), one input per likelihood tensor ---
        for idx in range(n_lik):
            rows_i, tile_i, nblk_i = lik_meta[idx]
            l_ref_i = lik_refs[idx]

            @pl.when(g < nblk_i)
            def _rate(l_ref=l_ref_i, rows=rows_i, tile=tile_i):
                lg = jnp.log(l_ref[...].astype(jnp.float32))
                if rows % tile:
                    rows_left = rows - g * tile
                    rid = jax.lax.broadcasted_iota(jnp.int32, lg.shape, 0)
                    lg = jnp.where(rid < rows_left, lg, 0.0)
                acc_log[...] += jnp.sum(
                    lg.reshape(tile // _SUBLANE, _SUBLANE, _LANE), axis=0)

        # --- epilogue: reduce the two single-vreg accumulators ---
        @pl.when(j == bps - 1)
        def _finalize():
            sq_total = jnp.sum(acc_sq[...])
            log_total = jnp.sum(acc_log[...])
            lane = jax.lax.broadcasted_iota(jnp.int32, (1, _LANE), 1)
            out_ref[...] = (jnp.where(lane == 0, sq_total, 0.0)
                            + jnp.where(lane == 1, log_total, 0.0))

    return kernel


def rate_distortion(output, target, lmbda=0.01):
    """JAX/Pallas equivalent of RateDistortion.forward."""
    target = jnp.asarray(target)
    x_hat = jnp.asarray(output['x_hat'])
    liks = [jnp.asarray(v) for v in output['likelihoods'].values()]
    if not liks:
        liks = [jnp.ones((_SUBLANE * _LANE,), jnp.float32)]   # log(1)=0

    N, _, H, W = target.shape
    num_pixels = N * H * W
    n_mse = target.size

    # Distortion inputs (0-pad is neutral: diff of pads is 0).
    x_slab = _flat_to_slab(x_hat.reshape(-1), 0)
    t_slab = _flat_to_slab(target.reshape(-1), 0)
    x_rows = x_slab.shape[0]
    x_item = max(jnp.dtype(x_hat.dtype).itemsize, jnp.dtype(target.dtype).itemsize)
    x_tile = _pick_tile(x_rows, x_item)
    n_mse_blocks = pl.cdiv(x_rows, x_tile)

    # Rate inputs: one slab per likelihood tensor (no concatenate round-trip).
    lik_slabs, lik_meta = [], []
    for v in liks:
        slab = _flat_to_slab(v.reshape(-1), 1)           # log(1) = 0 pad
        rows = slab.shape[0]
        tile = _pick_tile(rows, jnp.dtype(v.dtype).itemsize)
        lik_slabs.append(slab)
        lik_meta.append((rows, tile, pl.cdiv(rows, tile)))

    num_splits, semantics = _hw_config()
    total_blocks = max([n_mse_blocks] + [m[2] for m in lik_meta])
    bps = pl.cdiv(total_blocks, num_splits)               # blocks per split

    kernel = _make_kernel(x_rows, x_tile, n_mse_blocks, lik_meta, bps)

    def clamp_map(nblocks):
        # Clamp past-the-end steps to the last block: the block index stays
        # constant across consecutive steps, so no redundant DMA is issued and
        # the kernel skips the compute via pl.when.
        return lambda c, j: (jnp.minimum(c * bps + j, nblocks - 1), 0)

    in_specs = [
        pl.BlockSpec((x_tile, _LANE), clamp_map(n_mse_blocks)),
        pl.BlockSpec((x_tile, _LANE), clamp_map(n_mse_blocks)),
    ] + [
        pl.BlockSpec((tile, _LANE), clamp_map(nblk))
        for (_, tile, nblk) in lik_meta
    ]

    partials = pl.pallas_call(
        kernel,
        out_shape=jax.ShapeDtypeStruct((num_splits, _LANE), jnp.float32),
        grid=(num_splits, bps),
        in_specs=in_specs,
        out_specs=pl.BlockSpec((1, _LANE), lambda c, j: (c, 0)),
        scratch_shapes=[
            pltpu.VMEM((_SUBLANE, _LANE), jnp.float32),   # single-vreg sq acc
            pltpu.VMEM((_SUBLANE, _LANE), jnp.float32),   # single-vreg log acc
        ],
        compiler_params=pltpu.CompilerParams(dimension_semantics=semantics),
    )(x_slab, t_slab, *lik_slabs)

    # Trivial scalar epilogue in plain JAX (lmbda changes never retrace).
    sq_total = jnp.sum(partials[:, 0])
    log_total = jnp.sum(partials[:, 1])
    mse = sq_total / n_mse
    bpp = log_total * (1.0 / (-math.log(2.0) * num_pixels))
    loss = lmbda * mse + bpp

    return {
        'img_bpp': bpp,
        'x_hat': output['x_hat'],
        'mse_loss': mse,
        'loss': loss,
    }


def _reference(output, target, lmbda=0.01):
    """Plain-JAX reference mirroring the PyTorch module exactly."""
    target = jnp.asarray(target, jnp.float32)
    N, _, H, W = target.shape
    num_pixels = N * H * W
    bpp = sum(jnp.sum(jnp.log(jnp.asarray(l, jnp.float32)))
              / (-math.log(2.0) * num_pixels)
              for l in output['likelihoods'].values())
    mse = jnp.mean((jnp.asarray(output['x_hat'], jnp.float32) - target) ** 2)
    return {'img_bpp': bpp, 'mse_loss': mse, 'loss': lmbda * mse + bpp}


if __name__ == "__main__":
    key = jax.random.PRNGKey(0)
    k1, k2, k3, k4 = jax.random.split(key, 4)

    N, C, H, W = 2, 4, 16, 16
    target = jax.random.normal(k1, (N, C, H, W), dtype=jnp.float32)
    x_hat = target + 0.1 * jax.random.normal(k2, (N, C, H, W), dtype=jnp.float32)

    # Typical compression-model likelihoods: two tensors of positive probs.
    lik_y = jax.random.uniform(k3, (N, 8, 4, 4), dtype=jnp.float32,
                               minval=0.05, maxval=1.0)
    lik_z = jax.random.uniform(k4, (N, 4, 2, 2), dtype=jnp.float32,
                               minval=0.05, maxval=1.0)

    output = {'x_hat': x_hat, 'likelihoods': {'y': lik_y, 'z': lik_z}}

    out = rate_distortion(output, target, lmbda=0.01)
    jax.block_until_ready(out['loss'])

    ref = _reference(output, target, lmbda=0.01)
    assert jnp.allclose(out['mse_loss'], ref['mse_loss'], rtol=1e-5, atol=1e-6)
    assert jnp.allclose(out['img_bpp'], ref['img_bpp'], rtol=1e-5, atol=1e-6)
    assert jnp.allclose(out['loss'], ref['loss'], rtol=1e-5, atol=1e-6)

    print("KERNEL_OK")
</pallas_src>

<mosaic_0001>
module attributes {stable_mosaic.version = 11 : i64} {
  func.func @kernel(%arg0: i32, %arg1: i32, %arg2: memref<16x128xf32, #tpu.memory_space<vmem>>, %arg3: memref<16x128xf32, #tpu.memory_space<vmem>>, %arg4: memref<8x128xf32, #tpu.memory_space<vmem>>, %arg5: memref<8x128xf32, #tpu.memory_space<vmem>>, %arg6: memref<1x128xf32, #tpu.memory_space<vmem>>, %arg7: memref<8x128xf32, #tpu.memory_space<vmem>>, %arg8: memref<8x128xf32, #tpu.memory_space<vmem>>) attributes {dimension_semantics = [#tpu.dimension_semantics<arbitrary>, #tpu.dimension_semantics<arbitrary>], iteration_bounds = array<i64: 1, 1>, scalar_prefetch = 0 : i64, scratch_operands = 2 : i64, tpu.core_type = #tpu.core_type<tc>, window_params = [{transform_indices = @transform_0, window_bounds = array<i64: 16, 128>}, {transform_indices = @transform_1, window_bounds = array<i64: 16, 128>}, {transform_indices = @transform_2, window_bounds = array<i64: 8, 128>}, {transform_indices = @transform_3, window_bounds = array<i64: 8, 128>}, {transform_indices = @transform_4, window_bounds = array<i64: 1, 128>}]} {
    %c1_i32 = arith.constant 1 : i32
    %0 = arith.muli %arg0, %c1_i32 : i32
    %1 = arith.addi %0, %arg1 : i32
    %c0_i32 = arith.constant 0 : i32
    %2 = arith.cmpi eq, %arg1, %c0_i32 : i32
    %3 = arith.extui %2 : i1 to i32
    %c0_i32_0 = arith.constant 0 : i32
    %4 = arith.cmpi ne, %3, %c0_i32_0 : i32
    scf.if %4 {
      %cst = arith.constant 0.000000e+00 : f32
      %17 = vector.broadcast %cst : f32 to vector<8x128xf32>
      %c0 = arith.constant 0 : index
      %c0_9 = arith.constant 0 : index
      %18 = vector.load %arg7[%c0, %c0_9] : memref<8x128xf32, #tpu.memory_space<vmem>>, vector<8x128xf32>
      tpu.vector_store %arg7[%c0, %c0_9], %17 {strides = array<i32>} : memref<8x128xf32, #tpu.memory_space<vmem>>, vector<8x128xf32>,
      %cst_10 = arith.constant 0.000000e+00 : f32
      %19 = vector.broadcast %cst_10 : f32 to vector<8x128xf32>
      %c0_11 = arith.constant 0 : index
      %c0_12 = arith.constant 0 : index
      %20 = vector.load %arg8[%c0_11, %c0_12] : memref<8x128xf32, #tpu.memory_space<vmem>>, vector<8x128xf32>
      tpu.vector_store %arg8[%c0_11, %c0_12], %19 {strides = array<i32>} : memref<8x128xf32, #tpu.memory_space<vmem>>, vector<8x128xf32>,
    } else {
    }
    %c1_i32_1 = arith.constant 1 : i32
    %5 = arith.cmpi slt, %1, %c1_i32_1 : i32
    %6 = arith.extui %5 : i1 to i32
    %c0_i32_2 = arith.constant 0 : i32
    %7 = arith.cmpi ne, %6, %c0_i32_2 : i32
    scf.if %7 {
      %c0 = arith.constant 0 : index
      %c0_9 = arith.constant 0 : index
      %17 = vector.load %arg2[%c0, %c0_9] : memref<16x128xf32, #tpu.memory_space<vmem>>, vector<16x128xf32>
      %c0_10 = arith.constant 0 : index
      %c0_11 = arith.constant 0 : index
      %18 = vector.load %arg3[%c0_10, %c0_11] : memref<16x128xf32, #tpu.memory_space<vmem>>, vector<16x128xf32>
      %19 = arith.subf %17, %18 : vector<16x128xf32>
      %20 = arith.mulf %19, %19 : vector<16x128xf32>
      %c0_12 = arith.constant 0 : index
      %c0_13 = arith.constant 0 : index
      %21 = vector.load %arg7[%c0_12, %c0_13] : memref<8x128xf32, #tpu.memory_space<vmem>>, vector<8x128xf32>
      %22 = vector.shape_cast %20 : vector<16x128xf32> to vector<2x8x128xf32>
      %cst = arith.constant dense<0.000000e+00> : vector<8x128xf32>
      %23 = vector.multi_reduction <add>, %22, %cst [0] : vector<2x8x128xf32> to vector<8x128xf32>
      %24 = arith.addf %21, %23 : vector<8x128xf32>
      %c0_14 = arith.constant 0 : index
      %c0_15 = arith.constant 0 : index
      %25 = vector.load %arg7[%c0_14, %c0_15] : memref<8x128xf32, #tpu.memory_space<vmem>>, vector<8x128xf32>
      tpu.vector_store %arg7[%c0_14, %c0_15], %24 {strides = array<i32>} : memref<8x128xf32, #tpu.memory_space<vmem>>, vector<8x128xf32>,
    } else {
    }
    %c1_i32_3 = arith.constant 1 : i32
    %8 = arith.cmpi slt, %1, %c1_i32_3 : i32
    %9 = arith.extui %8 : i1 to i32
    %c0_i32_4 = arith.constant 0 : i32
    %10 = arith.cmpi ne, %9, %c0_i32_4 : i32
    scf.if %10 {
      %c0 = arith.constant 0 : index
      %c0_9 = arith.constant 0 : index
      %17 = vector.load %arg4[%c0, %c0_9] : memref<8x128xf32, #tpu.memory_space<vmem>>, vector<8x128xf32>
      %18 = math.log %17 : vector<8x128xf32>
      %c0_10 = arith.constant 0 : index
      %c0_11 = arith.constant 0 : index
      %19 = vector.load %arg8[%c0_10, %c0_11] : memref<8x128xf32, #tpu.memory_space<vmem>>, vector<8x128xf32>
      %20 = vector.shape_cast %18 : vector<8x128xf32> to vector<1x8x128xf32>
      %cst = arith.constant dense<0.000000e+00> : vector<8x128xf32>
      %21 = vector.multi_reduction <add>, %20, %cst [0] : vector<1x8x128xf32> to vector<8x128xf32>
      %22 = arith.addf %19, %21 : vector<8x128xf32>
      %c0_12 = arith.constant 0 : index
      %c0_13 = arith.constant 0 : index
      %23 = vector.load %arg8[%c0_12, %c0_13] : memref<8x128xf32, #tpu.memory_space<vmem>>, vector<8x128xf32>
      tpu.vector_store %arg8[%c0_12, %c0_13], %22 {strides = array<i32>} : memref<8x128xf32, #tpu.memory_space<vmem>>, vector<8x128xf32>,
    } else {
    }
    %c1_i32_5 = arith.constant 1 : i32
    %11 = arith.cmpi slt, %1, %c1_i32_5 : i32
    %12 = arith.extui %11 : i1 to i32
    %c0_i32_6 = arith.constant 0 : i32
    %13 = arith.cmpi ne, %12, %c0_i32_6 : i32
    scf.if %13 {
      %c0 = arith.constant 0 : index
      %c0_9 = arith.constant 0 : index
      %17 = vector.load %arg5[%c0, %c0_9] : memref<8x128xf32, #tpu.memory_space<vmem>>, vector<8x128xf32>
      %18 = math.log %17 : vector<8x128xf32>
      %c0_10 = arith.constant 0 : index
      %c0_11 = arith.constant 0 : index
      %19 = vector.load %arg8[%c0_10, %c0_11] : memref<8x128xf32, #tpu.memory_space<vmem>>, vector<8x128xf32>
      %20 = vector.shape_cast %18 : vector<8x128xf32> to vector<1x8x128xf32>
      %cst = arith.constant dense<0.000000e+00> : vector<8x128xf32>
      %21 = vector.multi_reduction <add>, %20, %cst [0] : vector<1x8x128xf32> to vector<8x128xf32>
      %22 = arith.addf %19, %21 : vector<8x128xf32>
      %c0_12 = arith.constant 0 : index
      %c0_13 = arith.constant 0 : index
      %23 = vector.load %arg8[%c0_12, %c0_13] : memref<8x128xf32, #tpu.memory_space<vmem>>, vector<8x128xf32>
      tpu.vector_store %arg8[%c0_12, %c0_13], %22 {strides = array<i32>} : memref<8x128xf32, #tpu.memory_space<vmem>>, vector<8x128xf32>,
    } else {
    }
    %c0_i32_7 = arith.constant 0 : i32
    %14 = arith.cmpi eq, %arg1, %c0_i32_7 : i32
    %15 = arith.extui %14 : i1 to i32
    %c0_i32_8 = arith.constant 0 : i32
    %16 = arith.cmpi ne, %15, %c0_i32_8 : i32
    scf.if %16 {
      %c0 = arith.constant 0 : index
      %c0_9 = arith.constant 0 : index
      %17 = vector.load %arg7[%c0, %c0_9] : memref<8x128xf32, #tpu.memory_space<vmem>>, vector<8x128xf32>
      %18 = vector.shape_cast %17 : vector<8x128xf32> to vector<1x8x128xf32>
      %cst = arith.constant dense<0.000000e+00> : vector<1xf32>
      %19 = vector.multi_reduction <add>, %18, %cst [1, 2] : vector<1x8x128xf32> to vector<1xf32>
      %20 = vector.shape_cast %19 : vector<1xf32> to vector<1x1x1xf32>
      %21 = vector.extract %20[0, 0, 0] : f32 from vector<1x1x1xf32>
      %c0_10 = arith.constant 0 : index
      %c0_11 = arith.constant 0 : index
      %22 = vector.load %arg8[%c0_10, %c0_11] : memref<8x128xf32, #tpu.memory_space<vmem>>, vector<8x128xf32>
      %23 = vector.shape_cast %22 : vector<8x128xf32> to vector<1x8x128xf32>
      %cst_12 = arith.constant dense<0.000000e+00> : vector<1xf32>
      %24 = vector.multi_reduction <add>, %23, %cst_12 [1, 2] : vector<1x8x128xf32> to vector<1xf32>
      %25 = vector.shape_cast %24 : vector<1xf32> to vector<1x1x1xf32>
      %26 = vector.extract %25[0, 0, 0] : f32 from vector<1x1x1xf32>
      %27 = tpu.iota {dimensions = array<i32: 1>} : vector<1x128xi32>
      %c0_i32_13 = arith.constant 0 : i32
      %28 = vector.broadcast %c0_i32_13 : i32 to vector<1x128xi32>
      %29 = arith.cmpi eq, %27, %28 : vector<1x128xi32>
      %cst_14 = arith.constant 0.000000e+00 : f32
      %30 = vector.broadcast %21 : f32 to vector<1x128xf32>
      %31 = vector.broadcast %cst_14 : f32 to vector<1x128xf32>
      %32 = arith.select %29, %30, %31 : vector<1x128xi1>, vector<1x128xf32>
      %c1_i32_15 = arith.constant 1 : i32
      %33 = vector.broadcast %c1_i32_15 : i32 to vector<1x128xi32>
      %34 = arith.cmpi eq, %27, %33 : vector<1x128xi32>
      %cst_16 = arith.constant 0.000000e+00 : f32
      %35 = vector.broadcast %26 : f32 to vector<1x128xf32>
      %36 = vector.broadcast %cst_16 : f32 to vector<1x128xf32>
      %37 = arith.select %34, %35, %36 : vector<1x128xi1>, vector<1x128xf32>
      %38 = arith.addf %32, %37 : vector<1x128xf32>
      %c0_17 = arith.constant 0 : index
      %c0_18 = arith.constant 0 : index
      %39 = vector.load %arg6[%c0_17, %c0_18] : memref<1x128xf32, #tpu.memory_space<vmem>>, vector<1x128xf32>
      tpu.vector_store %arg6[%c0_17, %c0_18], %38 {strides = array<i32>} : memref<1x128xf32, #tpu.memory_space<vmem>>, vector<1x128xf32>,
    } else {
    }
    return
  }
  func.func @transform_0(%arg0: i32, %arg1: i32) -> (i32, i32) {
    %c1_i32 = arith.constant 1 : i32
    %0 = arith.muli %arg0, %c1_i32 : i32
    %1 = arith.addi %0, %arg1 : i32
    %c0_i32 = arith.constant 0 : i32
    %2 = arith.minsi %1, %c0_i32 : i32
    %c0_i32_0 = arith.constant 0 : i32
    %c0_i32_1 = arith.constant 0 : i32
    return %2, %c0_i32_0 : i32, i32
  }
  func.func @transform_1(%arg0: i32, %arg1: i32) -> (i32, i32) {
    %c1_i32 = arith.constant 1 : i32
    %0 = arith.muli %arg0, %c1_i32 : i32
    %1 = arith.addi %0, %arg1 : i32
    %c0_i32 = arith.constant 0 : i32
    %2 = arith.minsi %1, %c0_i32 : i32
    %c0_i32_0 = arith.constant 0 : i32
    %c0_i32_1 = arith.constant 0 : i32
    return %2, %c0_i32_0 : i32, i32
  }
  func.func @transform_2(%arg0: i32, %arg1: i32) -> (i32, i32) {
    %c1_i32 = arith.constant 1 : i32
    %0 = arith.muli %arg0, %c1_i32 : i32
    %1 = arith.addi %0, %arg1 : i32
    %c0_i32 = arith.constant 0 : i32
    %2 = arith.minsi %1, %c0_i32 : i32
    %c0_i32_0 = arith.constant 0 : i32
    %c0_i32_1 = arith.constant 0 : i32
    return %2, %c0_i32_0 : i32, i32
  }
  func.func @transform_3(%arg0: i32, %arg1: i32) -> (i32, i32) {
    %c1_i32 = arith.constant 1 : i32
    %0 = arith.muli %arg0, %c1_i32 : i32
    %1 = arith.addi %0, %arg1 : i32
    %c0_i32 = arith.constant 0 : i32
    %2 = arith.minsi %1, %c0_i32 : i32
    %c0_i32_0 = arith.constant 0 : i32
    %c0_i32_1 = arith.constant 0 : i32
    return %2, %c0_i32_0 : i32, i32
  }
  func.func @transform_4(%arg0: i32, %arg1: i32) -> (i32, i32) {
    %c0_i32 = arith.constant 0 : i32
    %c0_i32_0 = arith.constant 0 : i32
    return %arg0, %c0_i32 : i32, i32
  }
}

</mosaic_0001>

<llo_original>
// kernel: tpu_custom_call.1
$region0: #{tpu_custom_call.1}
  #allocation0 [shape = 'u32[]', space=smem, size = 0x4, offset = 0x4, fixed_abs, tag = 'smem constant byte address 0x4 - core index']
  #allocation1 [shape = 'u32[72,128]{1,0:T(1,128)}', space=vmem, size = 0x9000, scoped, tag = 'internal scratch']
  #allocation2 [shape = 'f32[8,128]{1,0:T(8,128)}', space=vmem, size = 0x1000, scoped, tag = 'scratch operand']
  #allocation3 [shape = 'f32[8,128]{1,0:T(8,128)}', space=vmem, size = 0x1000, scoped, tag = 'scratch operand']
  %s0 = inlined_call_operand.hbm [shape: f32[16,128], index: 0, kind: input, shape index: {}]
  %s1 = inlined_call_operand.hbm [shape: f32[16,128], index: 1, kind: input, shape index: {}]
  %s2 = inlined_call_operand.hbm [shape: f32[8,128], index: 2, kind: input, shape index: {}]
  %s3 = inlined_call_operand.hbm [shape: f32[8,128], index: 3, kind: input, shape index: {}]
  %s4 = inlined_call_operand.hbm [shape: f32[1,128], index: 4, kind: output, shape index: {}]
  %s5 = sld [smem:[#allocation0]]
  $region54: #{tpu_custom_call.1} parent=0
    _
  %s7 = ssub.s32 1, %s5
  %s8 = scalar_select 0, %s7, %s5
  $region1: #{tpu_custom_call.1} parent=0
    #allocation4 [shape = 'u8[8192]{0}', space=vmem, size = 0x2000, scoped, tag = 'input window, operand 0, single buffered']
    #allocation5 [shape = 's32[1]{0}', space=sflag, size = 0x4, scoped, tag = 'scoped memory for tpu_custom_call.1']
    #allocation6 [shape = 's32[1]{0}', space=sflag, size = 0x4, scoped, tag = 'scoped memory for tpu_custom_call.1']
    #allocation7 [shape = 'u8[8192]{0}', space=vmem, size = 0x2000, scoped, tag = 'input window, operand 1, single buffered']
    #allocation8 [shape = 's32[1]{0}', space=sflag, size = 0x4, scoped, tag = 'scoped memory for tpu_custom_call.1']
    #allocation9 [shape = 'u8[4096]{0}', space=vmem, size = 0x1000, scoped, tag = 'input window, operand 2, single buffered']
    #allocation10 [shape = 'u8[4096]{0}', space=vmem, size = 0x1000, scoped, tag = 'input window, operand 3, single buffered']
    #allocation11 [shape = 's32[1]{0}', space=sflag, size = 0x4, scoped, tag = 'scoped memory for tpu_custom_call.1']
    #allocation12 [shape = 'u8[512]{0}', space=vmem, size = 0x400, scoped, tag = 'output window, operand 0, single buffered']
    %9 = vsyncpa [#allocation5], 0
    %10 = vsyncpa [#allocation8], 0
    %11 = vsyncpa [#allocation11], 0
    %12 = vsyncpa [#allocation6], 0
    // Predicated region
    $region2: #{tpu_custom_call.1} parent=1 // pred_check
      _
    $region3: #{tpu_custom_call.1} parent=1 // pred_check_branch
      %14 = sbr.rel (0) target = $region5
    $region4: #{tpu_custom_call.1} parent=1 // pred_region
      %s15 = sadd.s32 0, 0
      %p16 = scmp.lt.s32.totalorder %s15, 0
      %s17 = scalar_select %p16, %s15, 0
      %s18 = smul.u32 2, %s17
      %20 = vsyncadd [#allocation5], 0
      %s21 = smul.addr %s18, 8
      %s22 = scalar_lea.hbm %s0, %s21
      %s23 = sshll.u32 %s22, 4
      %s24 = int_to_ptr.hbm [resolvable:$true] %s23
      %s25 = sshll.u32 [#allocation4], 4
      %s26 = int_to_ptr.vmem [resolvable:$true] %s25
      %31 = dma.hbm_to_vmem [thread:$0]  %s24, 256, %s26, [#allocation5], 128, 128, 8
    $region5: #{tpu_custom_call.1} parent=1 // pred_fallthru
      _
    // Predicated region
    $region6: #{tpu_custom_call.1} parent=1 // pred_check
      _
    $region7: #{tpu_custom_call.1} parent=1 // pred_check_branch
      %33 = sbr.rel (0) target = $region9
    $region8: #{tpu_custom_call.1} parent=1 // pred_region
      %s34 = sadd.s32 0, 0
      %p35 = scmp.lt.s32.totalorder %s34, 0
      %s36 = scalar_select %p35, %s34, 0
      %s37 = smul.u32 2, %s36
      %39 = vsyncadd [#allocation8], 0
      %s40 = smul.addr %s37, 8
      %s41 = scalar_lea.hbm %s1, %s40
      %s42 = sshll.u32 %s41, 4
      %s43 = int_to_ptr.hbm [resolvable:$true] %s42
      %s44 = sshll.u32 [#allocation7], 4
      %s45 = int_to_ptr.vmem [resolvable:$true] %s44
      %50 = dma.hbm_to_vmem [thread:$0]  %s43, 256, %s45, [#allocation8], 128, 128, 8
    $region9: #{tpu_custom_call.1} parent=1 // pred_fallthru
      _
    // Predicated region
    $region10: #{tpu_custom_call.1} parent=1 // pred_check
      _
    $region11: #{tpu_custom_call.1} parent=1 // pred_check_branch
      %52 = sbr.rel (0) target = $region13
    $region12: #{tpu_custom_call.1} parent=1 // pred_region
      %s53 = sadd.s32 0, 0
      %p54 = scmp.lt.s32.totalorder %s53, 0
      %s55 = scalar_select %p54, %s53, 0
      %57 = vsyncadd [#allocation8], 0
      %s58 = smul.addr %s55, 8
      %s59 = scalar_lea.hbm %s2, %s58
      %s61 = sshll.u32 %s59, 4
      %s62 = int_to_ptr.hbm [resolvable:$true] %s61
      %s63 = sshll.u32 [#allocation9], 4
      %s64 = int_to_ptr.vmem [resolvable:$true] %s63
      %66 = dma.hbm_to_vmem [thread:$0]  %s62, 128, %s64, [#allocation8]
    $region13: #{tpu_custom_call.1} parent=1 // pred_fallthru
      _
    // Predicated region
    $region14: #{tpu_custom_call.1} parent=1 // pred_check
      _
    $region15: #{tpu_custom_call.1} parent=1 // pred_check_branch
      %68 = sbr.rel (0) target = $region17
    $region16: #{tpu_custom_call.1} parent=1 // pred_region
      %s69 = sadd.s32 0, 0
      %p70 = scmp.lt.s32.totalorder %s69, 0
      %s71 = scalar_select %p70, %s69, 0
      %73 = vsyncadd [#allocation11], 0
      %s74 = smul.addr %s71, 8
      %s75 = scalar_lea.hbm %s3, %s74
      %s77 = sshll.u32 %s75, 4
      %s78 = int_to_ptr.hbm [resolvable:$true] %s77
      %s79 = sshll.u32 [#allocation10], 4
      %s80 = int_to_ptr.vmem [resolvable:$true] %s79
      %82 = dma.hbm_to_vmem [thread:$0]  %s78, 128, %s80, [#allocation11]
    $region17: #{tpu_custom_call.1} parent=1 // pred_fallthru
      _
    // Predicated region
    $region18: #{tpu_custom_call.1} parent=1 // pred_check
      _
    $region19: #{tpu_custom_call.1} parent=1 // pred_check_branch
      %84 = sbr.rel (0) target = $region21
    $region20: #{tpu_custom_call.1} parent=1 // pred_region
      %86 = dma.done [#allocation5], 256
    $region21: #{tpu_custom_call.1} parent=1 // pred_fallthru
      _
    // Predicated region
    $region22: #{tpu_custom_call.1} parent=1 // pred_check
      _
    $region23: #{tpu_custom_call.1} parent=1 // pred_check_branch
      %88 = sbr.rel (0) target = $region25
    $region24: #{tpu_custom_call.1} parent=1 // pred_region
      %90 = dma.done [#allocation8], 256
    $region25: #{tpu_custom_call.1} parent=1 // pred_fallthru
      _
    // Predicated region
    $region26: #{tpu_custom_call.1} parent=1 // pred_check
      _
    $region27: #{tpu_custom_call.1} parent=1 // pred_check_branch
      %92 = sbr.rel (0) target = $region29
    $region28: #{tpu_custom_call.1} parent=1 // pred_region
      %94 = dma.done [#allocation8], 128
    $region29: #{tpu_custom_call.1} parent=1 // pred_fallthru
      _
    // Predicated region
    $region30: #{tpu_custom_call.1} parent=1 // pred_check
      _
    $region31: #{tpu_custom_call.1} parent=1 // pred_check_branch
      %96 = sbr.rel (0) target = $region33
    $region32: #{tpu_custom_call.1} parent=1 // pred_region
      %98 = dma.done [#allocation11], 128
    $region33: #{tpu_custom_call.1} parent=1 // pred_fallthru
      _
    %s99 = sadd.s32 0, 0
    %p100 = scmp.lt.s32.totalorder %s99, 0
    %s101 = scalar_select %p100, %s99, 0
    %s102 = smul.u32 2, %s101
    %s103 = sadd.s32 0, 0
    %p104 = scmp.lt.s32.totalorder %s103, 0
    %s105 = scalar_select %p104, %s103, 0
    %s106 = smul.u32 2, %s105
    %s107 = sadd.s32 0, 0
    %p108 = scmp.lt.s32.totalorder %s107, 0
    %s109 = scalar_select %p108, %s107, 0
    %s110 = sadd.s32 0, 0
    %p111 = scmp.lt.s32.totalorder %s110, 0
    %s112 = scalar_select %p111, %s110, 0
    %s113 = sadd.s32 0, 0
    %p114 = scmp.eq.s32.totalorder 0, 0
    // Predicated region
    $region34: #{tpu_custom_call.1} parent=1 // pred_check
      %p115 = pneg %p114
    $region35: #{tpu_custom_call.1} parent=1 // pred_check_branch
      %117 = sbr.rel (%p115) target = $region37
    $region36: #{tpu_custom_call.1} parent=1 // pred_region
      %118 = vst [vmem:[#allocation2] sm:$0xff] 0.0
      %119 = vst [vmem:[#allocation3] sm:$0xff] 0.0
    $region37: #{tpu_custom_call.1} parent=1 // pred_fallthru
      _
    %p120 = scmp.lt.s32.totalorder %s113, 1
    // Predicated region
    $region38: #{tpu_custom_call.1} parent=1 // pred_check
      %p121 = pneg %p120
    $region39: #{tpu_custom_call.1} parent=1 // pred_check_branch
      %123 = sbr.rel (%p121) target = $region41
    $region40: #{tpu_custom_call.1} parent=1 // pred_region
      %v124 = vld [vmem:[#allocation4] sm:$0xff]
      %v125 = vld [vmem:[#allocation4 + $0x8] sm:$0xff]
      %v126 = vld [vmem:[#allocation7] sm:$0xff]
      %v127 = vld [vmem:[#allocation7 + $0x8] sm:$0xff]
      %v128 = vsub.f32 %v124, %v126
      %v129 = vsub.f32 %v125, %v127
      %v130 = vmul.f32 %v128, %v128
      %v131 = vmul.f32 %v129, %v129
      %v132 = vld [vmem:[#allocation2] sm:$0xff]
      %v133 = vadd.f32 %v130, %v131
      %v134 = vadd.f32 %v132, %v133
      %135 = vst [vmem:[#allocation2] sm:$0xff] %v134
      %v136 = vld [vmem:[#allocation9] sm:$0xff]
      %v137 = vlog2.pop %v136
      %v138 = vmul.f32 %v137, 0.6931472
      %v139 = vld [vmem:[#allocation3] sm:$0xff]
      %v140 = vadd.f32 %v138, 0.0
      %v141 = vadd.f32 %v139, %v140
      %142 = vst [vmem:[#allocation3] sm:$0xff] %v141
      %v143 = vld [vmem:[#allocation10] sm:$0xff]
      %v144 = vlog2.pop %v143
      %v145 = vmul.f32 %v144, 0.6931472
      %v146 = vld [vmem:[#allocation3] sm:$0xff]
      %v147 = vadd.f32 %v145, 0.0
      %v148 = vadd.f32 %v146, %v147
      %149 = vst [vmem:[#allocation3] sm:$0xff] %v148
    $region41: #{tpu_custom_call.1} parent=1 // pred_fallthru
      _
    // Predicated region
    $region42: #{tpu_custom_call.1} parent=1 // pred_check
      %p150 = pneg %p114
    $region43: #{tpu_custom_call.1} parent=1 // pred_check_branch
      %152 = sbr.rel (%p150) target = $region45
    $region44: #{tpu_custom_call.1} parent=1 // pred_region
      %v153 = vld [vmem:[#allocation2] sm:$0xff]
      %154 = vadd.xlane.f32.xlu0 %v153
      %v155 = vpop.xlane.xlu0 %154
      %v156 = vrot.slane %v155, 4
      %v157 = vadd.f32 %v155, %v156
      %v158 = vrot.slane %v157, 2
      %v159 = vadd.f32 %v157, %v158
      %v160 = vrot.slane %v159, 1
      %v161 = vadd.f32 %v159, %v160
      %s162 = vtos %v161
      %v163 = vld [vmem:[#allocation3] sm:$0xff]
      %164 = vadd.xlane.f32.xlu0 %v163
      %v165 = vpop.xlane.xlu0 %164
      %v166 = vrot.slane %v165, 4
      %v167 = vadd.f32 %v165, %v166
      %v168 = vrot.slane %v167, 2
      %v169 = vadd.f32 %v167, %v168
      %v170 = vrot.slane %v169, 1
      %v171 = vadd.f32 %v169, %v170
      %s172 = vtos %v171
      %v173 = vlaneseq
      %v174 = vand.u32 %v173, 127
      %vm175 = vcmp.eq.s32.totalorder %v174, 0
      %v176 = vstv %s162
      %v177 = vsel %vm175, %v176, 0.0
      %vm178 = vcmp.eq.s32.totalorder %v174, 1
      %v179 = vstv %s172
      %v180 = vsel %vm178, %v179, 0.0
      %v181 = vadd.f32 %v177, %v180
      %182 = vst [vmem:[#allocation12] sm:$0x1] %v181
    $region45: #{tpu_custom_call.1} parent=1 // pred_fallthru
      _
    // Predicated region
    $region46: #{tpu_custom_call.1} parent=1 // pred_check
      _
    $region47: #{tpu_custom_call.1} parent=1 // pred_check_branch
      %184 = sbr.rel (0) target = $region49
    $region48: #{tpu_custom_call.1} parent=1 // pred_region
      %186 = vsyncadd [#allocation6], 0
      %s188 = sshll.u32 [#allocation12], 4
      %s189 = int_to_ptr.vmem [resolvable:$true] %s188
      %s190 = sshll.u32 %s4, 4
      %s191 = int_to_ptr.hbm [resolvable:$true] %s190
      %193 = dma.vmem_to_hbm [thread:$0]  %s189, 16, %s191, [#allocation6]
    $region49: #{tpu_custom_call.1} parent=1 // pred_fallthru
      _
    // Predicated region
    $region50: #{tpu_custom_call.1} parent=1 // pred_check
      _
    $region51: #{tpu_custom_call.1} parent=1 // pred_check_branch
      %195 = sbr.rel (0) target = $region53
    $region52: #{tpu_custom_call.1} parent=1 // pred_region
      %197 = dma.done [#allocation6], 16
    $region53: #{tpu_custom_call.1} parent=1 // pred_fallthru
      _
    %198 = vsyncpa [#allocation5], 1
    %199 = vsyncpa [#allocation8], 1
    %200 = vsyncpa [#allocation11], 1
    %201 = vsyncpa [#allocation6], 1

</llo_original>
